<compile_context>
chip_gen: v7x
topology: tpu7x:2x2x1
jax: 0.10.0
libtpu: 0.0.40
codegen_flags: <defaults>
</compile_context>

<pallas_src>
import jax
import jax.numpy as jnp
from jax.experimental import pallas as pl
from jax.experimental.pallas import tpu as pltpu

LANE = 128          # vreg lane width (last dim)
SUBLANE = 8         # vreg sublane width (second-to-last dim)
VMEM_BUDGET = 32 * 1024 * 1024   # explicit scoped-VMEM budget (safe on v5e/v6e/v7x)


def _round_up(n, m):
    return ((n + m - 1) // m) * m


def _vmem_bytes(tb, In, H, A, x_bytes, w_bytes, o_bytes):
    """Conservative VMEM footprint estimate for one grid step."""
    return (2 * tb * In * x_bytes            # double-buffered x tiles
            + 2 * tb * A * o_bytes           # double-buffered out tiles
            + 2 * (In * H + H * A) * w_bytes  # weights (counted double-buffered)
            + 2 * (H + A) * 4                # f32 biases
            + 4 * tb * H)                    # f32 hidden intermediate


def policy_net_kernel(x_ref, w1_ref, b1_ref, w2_ref, b2_ref, o_ref):
    """One batch tile: out = relu(x @ w1 + b1) @ w2 + b2 (f32 accumulation)."""
    # In-kernel cast of x to the weight/operand dtype (no-op in f32 mode,
    # bf16 in the reduced-precision mode) — avoids an extra HBM pass.
    x = x_ref[...].astype(w1_ref.dtype)
    # fc1 on the MXU, f32 accumulate; bias + relu on the VPU in f32.
    h = jnp.dot(x, w1_ref[...], preferred_element_type=jnp.float32)
    h = jnp.maximum(h + b1_ref[...], 0.0)
    # fc2 on the MXU, f32 accumulate.
    out = jnp.dot(h.astype(w2_ref.dtype), w2_ref[...],
                  preferred_element_type=jnp.float32)
    o_ref[...] = (out + b2_ref[...]).astype(o_ref.dtype)


def prepare_policy_params(w1, b1, w2, b2, *, compute_dtype=None):
    """One-time parameter preparation (hoisted out of the forward path).

    w1: (In, H), b1: (H,), w2: (H, A), b2: (A,)  (transposed vs. torch Linear)
    compute_dtype: optional MXU operand dtype (e.g. jnp.bfloat16).  Biases stay
    float32 — they are added to the f32 accumulator inside the kernel.
    """
    w_dtype = compute_dtype if compute_dtype is not None else w1.dtype
    return (jnp.asarray(w1, w_dtype),
            jnp.asarray(b1, jnp.float32).reshape(1, -1),
            jnp.asarray(w2, w_dtype),
            jnp.asarray(b2, jnp.float32).reshape(1, -1))


def policy_network_forward(x, params, *, tile_b=512):
    """Fused PolicyNetwork forward: relu(x @ w1 + b1) @ w2 + b2.

    x:      (B, In) activations (float32; cast to the weight dtype in-kernel).
    params: output of prepare_policy_params.
    """
    w1, b1, w2, b2 = params
    B, In = x.shape
    H = w1.shape[1]
    A = w2.shape[1]
    out_dtype = x.dtype

    x_bytes = x.dtype.itemsize
    w_bytes = w1.dtype.itemsize
    o_bytes = jnp.dtype(out_dtype).itemsize

    # --- batch tiling -----------------------------------------------------
    # Enough tiles to respect tile_b and (when there is enough work) to give
    # v7x's two TensorCores at least one grid step each; tile derived from
    # cdiv(B, n_tiles) so the last tile is never mostly padding.
    n_tiles = max(pl.cdiv(B, tile_b), 2 if B >= 2 * SUBLANE else 1)
    tb = _round_up(pl.cdiv(B, n_tiles), SUBLANE)
    tb = min(tb, max(_round_up(tile_b, SUBLANE), SUBLANE))
    # Shrink the tile until the (double-buffered) working set fits the budget.
    while tb > SUBLANE and _vmem_bytes(tb, In, H, A,
                                       x_bytes, w_bytes, o_bytes) > VMEM_BUDGET:
        tb = _round_up(tb // 2, SUBLANE)
    n_tiles = pl.cdiv(B, tb)
    b_p = n_tiles * tb

    # Only the batch dim is padded; feature dims stay at their native sizes
    # (full-dim blocks are exempt from the 128-lane rule).  Padded batch rows
    # compute garbage (relu(b1) @ w2 + b2) and are sliced off below.
    x_p = x if b_p == B else jnp.pad(x, ((0, b_p - B), (0, 0)))

    # dtype-aware, unpadded-traffic cost estimate for the XLA scheduler.
    cost = pl.CostEstimate(
        flops=2 * B * (In * H + H * A),
        transcendentals=0,
        bytes_accessed=(B * In * x_bytes
                        + (In * H + H * A) * w_bytes
                        + (H + A) * 4
                        + B * A * o_bytes),
    )

    vmem = pltpu.MemorySpace.VMEM
    out_padded = pl.pallas_call(
        policy_net_kernel,
        out_shape=jax.ShapeDtypeStruct((b_p, A), out_dtype),
        grid=(n_tiles,),
        in_specs=[
            # x: marches down the batch dim with the grid (pipelined DMA).
            pl.BlockSpec((tb, In), lambda i: (i, 0), memory_space=vmem),
            # weights / biases: same block every step -> resident in VMEM.
            pl.BlockSpec((In, H), lambda i: (0, 0), memory_space=vmem),
            pl.BlockSpec((1, H), lambda i: (0, 0), memory_space=vmem),
            pl.BlockSpec((H, A), lambda i: (0, 0), memory_space=vmem),
            pl.BlockSpec((1, A), lambda i: (0, 0), memory_space=vmem),
        ],
        out_specs=pl.BlockSpec((tb, A), lambda i: (i, 0), memory_space=vmem),
        compiler_params=pltpu.CompilerParams(
            dimension_semantics=("parallel",),
            vmem_limit_bytes=VMEM_BUDGET,
        ),
        cost_estimate=cost,
    )(x_p, w1, b1, w2, b2)

    return out_padded if b_p == B else out_padded[:B]


def reference_forward(x, w1, b1, w2, b2):
    h = jnp.maximum(x @ w1 + b1, 0.0)
    return h @ w2 + b2


if __name__ == "__main__":
    batch = 2
    input_size = 32
    hidden_size = 32
    action_size = 8

    key = jax.random.PRNGKey(0)
    kx, k1, k2, k3, k4 = jax.random.split(key, 5)

    x = jax.random.normal(kx, (batch, input_size), dtype=jnp.float32)

    # Deterministic synthetic parameters (PyTorch Linear init ranges),
    # stored transposed to (in, out) for the kernel.
    bound1 = 1.0 / jnp.sqrt(input_size)
    bound2 = 1.0 / jnp.sqrt(hidden_size)
    w1 = jax.random.uniform(k1, (input_size, hidden_size), jnp.float32,
                            minval=-bound1, maxval=bound1)
    b1 = jax.random.uniform(k2, (hidden_size,), jnp.float32,
                            minval=-bound1, maxval=bound1)
    w2 = jax.random.uniform(k3, (hidden_size, action_size), jnp.float32,
                            minval=-bound2, maxval=bound2)
    b2 = jax.random.uniform(k4, (action_size,), jnp.float32,
                            minval=-bound2, maxval=bound2)

    ref = reference_forward(x, w1, b1, w2, b2)

    # Full-precision path: must match the reference tightly.
    params_f32 = prepare_policy_params(w1, b1, w2, b2)
    out = policy_network_forward(x, params_f32)
    out = jax.block_until_ready(out)
    assert out.shape == (batch, action_size)
    assert jnp.allclose(out, ref, atol=1e-5, rtol=1e-5)

    # Reduced-precision MXU path (bf16 operands, f32 accumulation/epilogue) —
    # the fast path on all generations; looser tolerance.
    params_bf16 = prepare_policy_params(w1, b1, w2, b2,
                                        compute_dtype=jnp.bfloat16)
    out_bf16 = policy_network_forward(x, params_bf16)
    out_bf16 = jax.block_until_ready(out_bf16)
    assert out_bf16.shape == (batch, action_size)
    assert jnp.allclose(out_bf16, ref, atol=5e-2, rtol=5e-2)

    print("KERNEL_OK")
</pallas_src>

<mosaic_0001>
module attributes {stable_mosaic.version = 11 : i64} {
  func.func @policy_net_kernel(%arg0: i32, %arg1: memref<8x32xf32, #tpu.memory_space<vmem>>, %arg2: memref<32x32xf32, #tpu.memory_space<vmem>>, %arg3: memref<1x32xf32, #tpu.memory_space<vmem>>, %arg4: memref<32x8xf32, #tpu.memory_space<vmem>>, %arg5: memref<1x8xf32, #tpu.memory_space<vmem>>, %arg6: memref<8x8xf32, #tpu.memory_space<vmem>>) attributes {dimension_semantics = [#tpu.dimension_semantics<parallel>], iteration_bounds = array<i64: 1>, scalar_prefetch = 0 : i64, scratch_operands = 0 : i64, tpu.core_type = #tpu.core_type<tc>, window_params = [{transform_indices = @transform_0, window_bounds = array<i64: 8, 32>}, {pipeline_mode = #tpu.pipeline_mode<synchronous>, transform_indices = @transform_1, window_bounds = array<i64: 32, 32>}, {pipeline_mode = #tpu.pipeline_mode<synchronous>, transform_indices = @transform_2, window_bounds = array<i64: 1, 32>}, {pipeline_mode = #tpu.pipeline_mode<synchronous>, transform_indices = @transform_3, window_bounds = array<i64: 32, 8>}, {pipeline_mode = #tpu.pipeline_mode<synchronous>, transform_indices = @transform_4, window_bounds = array<i64: 1, 8>}, {transform_indices = @transform_5, window_bounds = array<i64: 8, 8>}]} {
    %c0 = arith.constant 0 : index
    %c0_0 = arith.constant 0 : index
    %0 = vector.load %arg1[%c0, %c0_0] : memref<8x32xf32, #tpu.memory_space<vmem>>, vector<8x32xf32>
    %c0_1 = arith.constant 0 : index
    %c0_2 = arith.constant 0 : index
    %1 = vector.load %arg2[%c0_1, %c0_2] : memref<32x32xf32, #tpu.memory_space<vmem>>, vector<32x32xf32>
    %cst = arith.constant dense<0.000000e+00> : vector<8x32xf32>
    %2 = tpu.matmul %0, %1, %cst {dimension_numbers = #tpu.dot_dimension_numbers<[1], [0], [0], [1], [0, 0, 1, 1], [], []>} : vector<8x32xf32>, vector<32x32xf32>, vector<8x32xf32> -> vector<8x32xf32>
    %c0_3 = arith.constant 0 : index
    %c0_4 = arith.constant 0 : index
    %3 = vector.load %arg3[%c0_3, %c0_4] : memref<1x32xf32, #tpu.memory_space<vmem>>, vector<1x32xf32>
    %4 = vector.broadcast %3 : vector<1x32xf32> to vector<8x32xf32>
    %5 = arith.addf %2, %4 : vector<8x32xf32>
    %cst_5 = arith.constant 0.000000e+00 : f32
    %6 = vector.broadcast %cst_5 : f32 to vector<8x32xf32>
    %7 = arith.maximumf %5, %6 : vector<8x32xf32>
    %c0_6 = arith.constant 0 : index
    %c0_7 = arith.constant 0 : index
    %8 = vector.load %arg4[%c0_6, %c0_7] : memref<32x8xf32, #tpu.memory_space<vmem>>, vector<32x8xf32>
    %cst_8 = arith.constant dense<0.000000e+00> : vector<8x8xf32>
    %9 = tpu.matmul %7, %8, %cst_8 {dimension_numbers = #tpu.dot_dimension_numbers<[1], [0], [0], [1], [0, 0, 1, 1], [], []>} : vector<8x32xf32>, vector<32x8xf32>, vector<8x8xf32> -> vector<8x8xf32>
    %c0_9 = arith.constant 0 : index
    %c0_10 = arith.constant 0 : index
    %10 = vector.load %arg5[%c0_9, %c0_10] : memref<1x8xf32, #tpu.memory_space<vmem>>, vector<1x8xf32>
    %11 = vector.broadcast %10 : vector<1x8xf32> to vector<8x8xf32>
    %12 = arith.addf %9, %11 : vector<8x8xf32>
    %c0_11 = arith.constant 0 : index
    %c0_12 = arith.constant 0 : index
    %13 = vector.load %arg6[%c0_11, %c0_12] : memref<8x8xf32, #tpu.memory_space<vmem>>, vector<8x8xf32>
    tpu.vector_store %arg6[%c0_11, %c0_12], %12 {strides = array<i32>} : memref<8x8xf32, #tpu.memory_space<vmem>>, vector<8x8xf32>,
    return
  }
  func.func @transform_0(%arg0: i32) -> (i32, i32) {
    %c0_i32 = arith.constant 0 : i32
    %c0_i32_0 = arith.constant 0 : i32
    return %arg0, %c0_i32 : i32, i32
  }
  func.func @transform_1(%arg0: i32) -> (i32, i32) {
    %c0_i32 = arith.constant 0 : i32
    %c0_i32_0 = arith.constant 0 : i32
    %c0_i32_1 = arith.constant 0 : i32
    return %c0_i32, %c0_i32_0 : i32, i32
  }
  func.func @transform_2(%arg0: i32) -> (i32, i32) {
    %c0_i32 = arith.constant 0 : i32
    %c0_i32_0 = arith.constant 0 : i32
    %c0_i32_1 = arith.constant 0 : i32
    return %c0_i32, %c0_i32_0 : i32, i32
  }
  func.func @transform_3(%arg0: i32) -> (i32, i32) {
    %c0_i32 = arith.constant 0 : i32
    %c0_i32_0 = arith.constant 0 : i32
    %c0_i32_1 = arith.constant 0 : i32
    return %c0_i32, %c0_i32_0 : i32, i32
  }
  func.func @transform_4(%arg0: i32) -> (i32, i32) {
    %c0_i32 = arith.constant 0 : i32
    %c0_i32_0 = arith.constant 0 : i32
    %c0_i32_1 = arith.constant 0 : i32
    return %c0_i32, %c0_i32_0 : i32, i32
  }
  func.func @transform_5(%arg0: i32) -> (i32, i32) {
    %c0_i32 = arith.constant 0 : i32
    %c0_i32_0 = arith.constant 0 : i32
    return %arg0, %c0_i32 : i32, i32
  }
}

</mosaic_0001>

<llo_original>
// kernel: tpu_custom_call.1
$region0: #{tpu_custom_call.1}
  #allocation0 [shape = 'u32[]', space=smem, size = 0x4, offset = 0x4, fixed_abs, tag = 'smem constant byte address 0x4 - core index']
  #allocation1 [shape = 'u32[144,128]{1,0:T(1,128)}', space=vmem, size = 0x12000, scoped, tag = 'internal scratch']
  %s0 = inlined_call_operand.vmem [shape: f32[8,32], index: 0, kind: input, shape index: {}]
  %s1 = inlined_call_operand.vmem [shape: f32[32,32], index: 1, kind: input, shape index: {}]
  %s2 = inlined_call_operand.vmem [shape: f32[1,32], index: 2, kind: input, shape index: {}]
  %s3 = inlined_call_operand.vmem [shape: f32[32,8], index: 3, kind: input, shape index: {}]
  %s4 = inlined_call_operand.vmem [shape: f32[1,8], index: 4, kind: input, shape index: {}]
  %s5 = inlined_call_operand.hbm [shape: f32[8,8], index: 5, kind: output, shape index: {}]
  %s6 = sld [smem:[#allocation0]]
  $region30: #{tpu_custom_call.1} parent=0
    _
  %s8 = ssub.s32 1, %s6
  %s9 = scalar_select 0, %s8, %s6
  $region1: #{tpu_custom_call.1} parent=0
    #allocation2 [shape = 'u8[4096]{0}', space=vmem, size = 0x1000, scoped, tag = 'output window, operand 0, single buffered']
    #allocation3 [shape = 's32[1]{0}', space=sflag, size = 0x4, scoped, tag = 'scoped memory for tpu_custom_call.1']
    %10 = vsyncpa [#allocation3], 0
    // Predicated region
    $region2: #{tpu_custom_call.1} parent=1 // pred_check
      _
    $region3: #{tpu_custom_call.1} parent=1 // pred_check_branch
      %12 = sbr.rel (0) target = $region5
    $region4: #{tpu_custom_call.1} parent=1 // pred_region
      _
    $region5: #{tpu_custom_call.1} parent=1 // pred_fallthru
      _
    // Predicated region
    $region6: #{tpu_custom_call.1} parent=1 // pred_check
      _
    $region7: #{tpu_custom_call.1} parent=1 // pred_check_branch
      %14 = sbr.rel (0) target = $region9
    $region8: #{tpu_custom_call.1} parent=1 // pred_region
      _
    $region9: #{tpu_custom_call.1} parent=1 // pred_fallthru
      _
    // Predicated region
    $region10: #{tpu_custom_call.1} parent=1 // pred_check
      _
    $region11: #{tpu_custom_call.1} parent=1 // pred_check_branch
      %16 = sbr.rel (0) target = $region13
    $region12: #{tpu_custom_call.1} parent=1 // pred_region
      _
    $region13: #{tpu_custom_call.1} parent=1 // pred_fallthru
      _
    // Predicated region
    $region14: #{tpu_custom_call.1} parent=1 // pred_check
      _
    $region15: #{tpu_custom_call.1} parent=1 // pred_check_branch
      %18 = sbr.rel (0) target = $region17
    $region16: #{tpu_custom_call.1} parent=1 // pred_region
      _
    $region17: #{tpu_custom_call.1} parent=1 // pred_fallthru
      _
    // Predicated region
    $region18: #{tpu_custom_call.1} parent=1 // pred_check
      _
    $region19: #{tpu_custom_call.1} parent=1 // pred_check_branch
      %20 = sbr.rel (0) target = $region21
    $region20: #{tpu_custom_call.1} parent=1 // pred_region
      _
    $region21: #{tpu_custom_call.1} parent=1 // pred_fallthru
      _
    %v21 = vld [vmem:[%s0] sm:$0xff]
    %v22 = vld [vmem:[%s1] sm:$0xff]
    %v23 = vld [vmem:[%s1 + $0x8] sm:$0xff]
    %v24 = vld [vmem:[%s1 + $0x10] sm:$0xff]
    %v25 = vld [vmem:[%s1 + $0x18] sm:$0xff]
    %v26 = vld [vmem:[%s2] sm:$0x1]
    %v28 = vlaneseq
    %v29 = vshrl.u32 %v28, 7
    %v30 = vsub.s32 0, %v29
    %v31 = vrot.slane %v26, %v30
    %vm33 = vcmask 261120
    %v35 = vsel %vm33, %v21, 0
    %37 = vmatprep.subr.mxu0 0.0
    %38 = vmatpush1.msra.mxu0 %v22
    %39 = vmatprep.subr.mxu0 0.0
    %40 = vmatpush1.msra.mxu0 %v23
    %41 = vmatprep.subr.mxu0 0.0
    %42 = vmatpush1.msra.mxu0 %v24
    %43 = vmatprep.subr.mxu0 0.0
    %44 = vmatpush1.msra.mxu0 %v25
    %45 = vmatprep.subr.mxu0 0.0
    %46 = vmatpush1.msra.mxu0 0.0
    %47 = vmatprep.subr.mxu0 0.0
    %48 = vmatpush1.msra.mxu0 0.0
    %49 = vmatprep.subr.mxu0 0.0
    %50 = vmatpush1.msra.mxu0 0.0
    %51 = vmatprep.subr.mxu0 0.0
    %52 = vmatpush1.msra.mxu0 0.0
    %53 = vmatprep.subr.mxu0 0.0
    %54 = vmatpush1.msra.mxu0 0.0
    %55 = vmatprep.subr.mxu0 0.0
    %56 = vmatpush1.msra.mxu0 0.0
    %57 = vmatprep.subr.mxu0 0.0
    %58 = vmatpush1.msra.mxu0 0.0
    %59 = vmatprep.subr.mxu0 0.0
    %60 = vmatpush1.msra.mxu0 0.0
    %61 = vmatprep.subr.mxu0 0.0
    %62 = vmatpush1.msra.mxu0 0.0
    %63 = vmatprep.subr.mxu0 0.0
    %64 = vmatpush1.msra.mxu0 0.0
    %65 = vmatprep.subr.mxu0 0.0
    %66 = vmatpush1.msra.mxu0 0.0
    %67 = vmatprep.subr.mxu0 0.0
    %68 = vmatpush1.msra.mxu0 0.0
    %69 = vmatprep.subr.mxu0 0.0
    %70 = vmatpush1.msra.mxu0 0.0
    %71 = vmatprep.subr.mxu0 0.0
    %72 = vmatpush1.msra.mxu0 0.0
    %73 = vmatprep.subr.mxu0 0.0
    %74 = vmatpush1.msra.mxu0 0.0
    %75 = vmatprep.subr.mxu0 0.0
    %76 = vmatpush1.msra.mxu0 0.0
    %77 = vmatprep.subr.mxu0 0.0
    %78 = vmatpush1.msra.mxu0 0.0
    %79 = vmatprep.subr.mxu0 0.0
    %80 = vmatpush1.msra.mxu0 0.0
    %81 = vmatprep.subr.mxu0 0.0
    %82 = vmatpush1.msra.mxu0 0.0
    %83 = vmatprep.subr.mxu0 0.0
    %84 = vmatpush1.msra.mxu0 0.0
    %85 = vmatprep.subr.mxu0 0.0
    %86 = vmatpush1.msra.mxu0 0.0
    %87 = vmatprep.subr.mxu0 0.0
    %88 = vmatpush1.msra.mxu0 0.0
    %89 = vmatprep.subr.mxu0 0.0
    %90 = vmatpush1.msra.mxu0 0.0
    %91 = vmatprep.subr.mxu0 0.0
    %92 = vmatpush1.msra.mxu0 0.0
    %93 = vmatprep.subr.mxu0 0.0
    %94 = vmatpush1.msra.mxu0 0.0
    %95 = vmatprep.subr.mxu0 0.0
    %96 = vmatpush1.msra.mxu0 0.0
    %97 = vmatprep.subr.mxu0 0.0
    %98 = vmatpush1.msra.mxu0 0.0
    %99 = vmatprep.subr.mxu0 0.0
    %100 = vmatpush1.msra.mxu0 0.0
    %101 = vmatprep.mubr.f32.mxu0 0.0
    %102 = vmatmul.mubr.f32.gmra.mrb[0].mxu0 %v35
    %v103 = vpop.f32.mrb[0].mxu0
    %v104 = vadd.f32 %v31, %v103
    %v105 = vpop.f32.mrb[0].mxu0
    %106 = vdwg.mxu0
    %v107 = vmax.f32 %v104, 0.0
    %v108 = vld [vmem:[%s3] sm:$0xff]
    %v109 = vld [vmem:[%s3 + $0x8] sm:$0xff]
    %v110 = vld [vmem:[%s3 + $0x10] sm:$0xff]
    %v111 = vld [vmem:[%s3 + $0x18] sm:$0xff]
    %v112 = vld [vmem:[%s4] sm:$0x1]
    %v114 = vlaneseq
    %v115 = vshrl.u32 %v114, 7
    %v116 = vsub.s32 0, %v115
    %v117 = vrot.slane %v112, %v116
    %v120 = vsel %vm33, %v107, 0
    %122 = vmatprep.subr.mxu0 0.0
    %123 = vmatpush1.msra.mxu0 %v108
    %124 = vmatprep.subr.mxu0 0.0
    %125 = vmatpush1.msra.mxu0 %v109
    %126 = vmatprep.subr.mxu0 0.0
    %127 = vmatpush1.msra.mxu0 %v110
    %128 = vmatprep.subr.mxu0 0.0
    %129 = vmatpush1.msra.mxu0 %v111
    %130 = vmatprep.subr.mxu0 0.0
    %131 = vmatpush1.msra.mxu0 0.0
    %132 = vmatprep.subr.mxu0 0.0
    %133 = vmatpush1.msra.mxu0 0.0
    %134 = vmatprep.subr.mxu0 0.0
    %135 = vmatpush1.msra.mxu0 0.0
    %136 = vmatprep.subr.mxu0 0.0
    %137 = vmatpush1.msra.mxu0 0.0
    %138 = vmatprep.subr.mxu0 0.0
    %139 = vmatpush1.msra.mxu0 0.0
    %140 = vmatprep.subr.mxu0 0.0
    %141 = vmatpush1.msra.mxu0 0.0
    %142 = vmatprep.subr.mxu0 0.0
    %143 = vmatpush1.msra.mxu0 0.0
    %144 = vmatprep.subr.mxu0 0.0
    %145 = vmatpush1.msra.mxu0 0.0
    %146 = vmatprep.subr.mxu0 0.0
    %147 = vmatpush1.msra.mxu0 0.0
    %148 = vmatprep.subr.mxu0 0.0
    %149 = vmatpush1.msra.mxu0 0.0
    %150 = vmatprep.subr.mxu0 0.0
    %151 = vmatpush1.msra.mxu0 0.0
    %152 = vmatprep.subr.mxu0 0.0
    %153 = vmatpush1.msra.mxu0 0.0
    %154 = vmatprep.subr.mxu0 0.0
    %155 = vmatpush1.msra.mxu0 0.0
    %156 = vmatprep.subr.mxu0 0.0
    %157 = vmatpush1.msra.mxu0 0.0
    %158 = vmatprep.subr.mxu0 0.0
    %159 = vmatpush1.msra.mxu0 0.0
    %160 = vmatprep.subr.mxu0 0.0
    %161 = vmatpush1.msra.mxu0 0.0
    %162 = vmatprep.subr.mxu0 0.0
    %163 = vmatpush1.msra.mxu0 0.0
    %164 = vmatprep.subr.mxu0 0.0
    %165 = vmatpush1.msra.mxu0 0.0
    %166 = vmatprep.subr.mxu0 0.0
    %167 = vmatpush1.msra.mxu0 0.0
    %168 = vmatprep.subr.mxu0 0.0
    %169 = vmatpush1.msra.mxu0 0.0
    %170 = vmatprep.subr.mxu0 0.0
    %171 = vmatpush1.msra.mxu0 0.0
    %172 = vmatprep.subr.mxu0 0.0
    %173 = vmatpush1.msra.mxu0 0.0
    %174 = vmatprep.subr.mxu0 0.0
    %175 = vmatpush1.msra.mxu0 0.0
    %176 = vmatprep.subr.mxu0 0.0
    %177 = vmatpush1.msra.mxu0 0.0
    %178 = vmatprep.subr.mxu0 0.0
    %179 = vmatpush1.msra.mxu0 0.0
    %180 = vmatprep.subr.mxu0 0.0
    %181 = vmatpush1.msra.mxu0 0.0
    %182 = vmatprep.subr.mxu0 0.0
    %183 = vmatpush1.msra.mxu0 0.0
    %184 = vmatprep.subr.mxu0 0.0
    %185 = vmatpush1.msra.mxu0 0.0
    %186 = vmatprep.mubr.f32.mxu0 0.0
    %187 = vmatmul.mubr.f32.gmra.mrb[0].mxu0 %v120
    %v188 = vpop.f32.mrb[0].mxu0
    %v189 = vadd.f32 %v117, %v188
    %v190 = vpop.f32.mrb[0].mxu0
    %191 = vdwg.mxu0
    %vm192 = vcmask 64512
    %193 = vst.msk [vmem:[#allocation2] sm:$0xff] %vm192, %v189
    // Predicated region
    $region22: #{tpu_custom_call.1} parent=1 // pred_check
      _
    $region23: #{tpu_custom_call.1} parent=1 // pred_check_branch
      %195 = sbr.rel (0) target = $region25
    $region24: #{tpu_custom_call.1} parent=1 // pred_region
      %s197 = ssub.s32 128, 128
      %198 = vsyncadd [#allocation3], %s197
      %s200 = sshll.u32 [#allocation2], 4
      %s201 = int_to_ptr.vmem [resolvable:$true] %s200
      %203 = dma.vmem_to_hbm [thread:$0]  %s201, 128, %s5, [#allocation3]
    $region25: #{tpu_custom_call.1} parent=1 // pred_fallthru
      _
    // Predicated region
    $region26: #{tpu_custom_call.1} parent=1 // pred_check
      _
    $region27: #{tpu_custom_call.1} parent=1 // pred_check_branch
      %205 = sbr.rel (0) target = $region29
    $region28: #{tpu_custom_call.1} parent=1 // pred_region
      %206 = dma.done [#allocation3], 128
    $region29: #{tpu_custom_call.1} parent=1 // pred_fallthru
      _
    %207 = vsyncpa [#allocation3], 1

</llo_original>
